<compile_context>
chip_gen: v5e
topology: v5e:2x2
jax: 0.10.0
libtpu: 0.0.40
codegen_flags: <defaults>
</compile_context>

<pallas_src>
import jax
import jax.numpy as jnp
from jax.experimental import pallas as pl
from jax.experimental.pallas import tpu as pltpu

# ---------------- model configuration (small, but consistent with the module) ----
B = 2                       # batch
CRYSTAL_DIM = 32            # crystal_encoder_output_dim
KSPACE_DIM = 32             # latent_dim_gnn
SCALAR_DIM = 16             # latent_dim_other_ffnn
PHYS_DIM = 16               # latent_dim_other_ffnn
SPEC_DIM = 32               # spectral_hidden
D_MODEL = CRYSTAL_DIM + KSPACE_DIM + SCALAR_DIM + PHYS_DIM + SPEC_DIM   # 128
FUSION_HIDDEN = (64, 32)    # config.FUSION_HIDDEN_DIMS
NUM_CLASSES = 2             # config.NUM_TOPOLOGY_CLASSES
ENS_HIDDEN = FUSION_HIDDEN[-1] // 2   # in_dim // 2 = 16
NUM_ENSEMBLE = 3            # self.num_ensemble_heads
HEAD_WIDTH = NUM_CLASSES + NUM_ENSEMBLE * ENS_HIDDEN   # 2 + 48 = 50
LN_EPS = 1e-5

# ---- weight-slab row layout (all offsets are multiples of 16 -> bf16 sublane aligned) ----
W_VO_R0, W_VO_R1 = 0, 128            # (128, 128)  folded attention Wv@Wo
W_F0_R0, W_F0_R1 = 128, 256          # (128,  64)  fusion linear 0
W_F1_R0, W_F1_R1 = 256, 320          # ( 64,  32)  fusion linear 1
W_HD_R0, W_HD_R1 = 320, 352          # ( 32,  50)  [topology_head | ensemble layer-1 x3]
W_E2_R0, W_E2_R1 = 352, 400          # ( 48,   2)  ensemble layer-2 (row-stacked)
W_SLAB_ROWS = 400

# ---- vector-slab row layout (one 128-lane f32 row per bias/gamma/beta) -----------------
V_BVO, V_GA, V_BA = 0, 1, 2          # folded attn bias, attn LN gamma/beta       (128)
V_FB0, V_FG0, V_FBT0 = 3, 4, 5      # fusion layer 0 bias / LN gamma / LN beta   (64)
V_FB1, V_FG1, V_FBT1 = 6, 7, 8      # fusion layer 1 bias / LN gamma / LN beta   (32)
V_HB = 9                             # [tb | eb1 x3]                              (50)
V_EB2 = 10                           # sum of eb2 over heads                      (2)
V_SLAB_ROWS = 16


def _layer_norm(v, gamma=None, beta=None, eps=LN_EPS):
    # E[x^2] - mu^2 form: the two cross-lane reductions are independent.
    mu = jnp.mean(v, axis=-1, keepdims=True)
    ms = jnp.mean(v * v, axis=-1, keepdims=True)
    var = ms - mu * mu
    y = (v - mu) * jax.lax.rsqrt(var + eps)
    if gamma is not None:
        y = y * gamma + beta
    return y


def classifier_kernel(x_ref, w_ref, v_ref, out_ref):
    f32 = jnp.float32
    bf16 = jnp.bfloat16
    H0, H1 = FUSION_HIDDEN

    # torch.cat(features, dim=-1) is done in the wrapper; here the first
    # F.layer_norm(x, x.shape[1:]) (no affine parameters).
    x = _layer_norm(x_ref[...].astype(f32))

    # TODO(synk): add_feature_noise (training-only Gaussian noise), Dropout layers and the
    # debug prints are skipped (eval semantics).

    # ---- MultiHeadAttention over a length-1 sequence -------------------------------
    # softmax over one key position == 1 exactly, so the block reduces to a single
    # folded projection: attn = x @ (Wv @ Wo) + (bv @ Wo + bo).
    attn = (jnp.dot(x.astype(bf16), w_ref[W_VO_R0:W_VO_R1, :],
                    preferred_element_type=f32)
            + v_ref[V_BVO:V_BVO + 1, :])
    x = _layer_norm(x + attn, v_ref[V_GA:V_GA + 1, :], v_ref[V_BA:V_BA + 1, :])

    # ---- fusion MLP: [Linear, LayerNorm, ReLU, Dropout] x 2 -------------------------
    h0 = (jnp.dot(x.astype(bf16), w_ref[W_F0_R0:W_F0_R1, 0:H0],
                  preferred_element_type=f32)
          + v_ref[V_FB0:V_FB0 + 1, 0:H0])
    h0 = jnp.maximum(
        _layer_norm(h0, v_ref[V_FG0:V_FG0 + 1, 0:H0], v_ref[V_FBT0:V_FBT0 + 1, 0:H0]), 0.0)

    h1 = (jnp.dot(h0.astype(bf16), w_ref[W_F1_R0:W_F1_R1, 0:H1],
                  preferred_element_type=f32)
          + v_ref[V_FB1:V_FB1 + 1, 0:H1])
    h1 = jnp.maximum(
        _layer_norm(h1, v_ref[V_FG1:V_FG1 + 1, 0:H1], v_ref[V_FBT1:V_FBT1 + 1, 0:H1]), 0.0)
    fused = jnp.clip(h1, -10.0, 10.0)              # torch.clamp(fused, -10, 10)
    fused_bf = fused.astype(bf16)

    # ---- topology head + ensemble layer-1 fused into ONE matmul --------------------
    head = (jnp.dot(fused_bf, w_ref[W_HD_R0:W_HD_R1, 0:HEAD_WIDTH],
                    preferred_element_type=f32)
            + v_ref[V_HB:V_HB + 1, 0:HEAD_WIDTH])
    main = head[:, 0:NUM_CLASSES]
    hh = jnp.maximum(head[:, NUM_CLASSES:HEAD_WIDTH], 0.0)

    # ---- ensemble layer-2 (row-stacked) + equal-weight average ----------------------
    ens = (jnp.dot(hh.astype(bf16), w_ref[W_E2_R0:W_E2_R1, 0:NUM_CLASSES],
                   preferred_element_type=f32)
           + v_ref[V_EB2:V_EB2 + 1, 0:NUM_CLASSES]) * (1.0 / NUM_ENSEMBLE)

    logits = 0.7 * main + 0.3 * ens

    # three plain stores; no lane-axis concat
    out_ref[0, :, :] = logits
    out_ref[1, :, :] = main
    out_ref[2, :, :] = ens


def enhanced_classifier_forward(embeddings, fp):
    """embeddings: dict of the five modality embeddings; fp: packed param slabs."""
    # wrapper-side concat of the modality embeddings (free at this size)
    x = jnp.concatenate(
        [embeddings["crystal_emb"], embeddings["kspace_emb"], embeddings["scalar_emb"],
         embeddings["phys_emb"], embeddings["spec_emb"]], axis=-1).astype(jnp.float32)
    b = x.shape[0]

    flops = 2 * b * (D_MODEL * D_MODEL + D_MODEL * FUSION_HIDDEN[0]
                     + FUSION_HIDDEN[0] * FUSION_HIDDEN[1]
                     + FUSION_HIDDEN[1] * HEAD_WIDTH
                     + NUM_ENSEMBLE * ENS_HIDDEN * NUM_CLASSES)
    bytes_accessed = (b * D_MODEL * 4                 # x
                      + W_SLAB_ROWS * 128 * 2         # bf16 weight slab
                      + V_SLAB_ROWS * 128 * 4         # f32 vector slab
                      + 3 * b * NUM_CLASSES * 4)      # packed output
    cost = pl.CostEstimate(flops=flops, transcendentals=4 * b, bytes_accessed=bytes_accessed)

    vmem = pltpu.MemorySpace.VMEM
    packed = pl.pallas_call(
        classifier_kernel,
        out_shape=jax.ShapeDtypeStruct((3, b, NUM_CLASSES), jnp.float32),
        in_specs=[pl.BlockSpec(memory_space=vmem)] * 3,
        out_specs=pl.BlockSpec(memory_space=vmem),
        cost_estimate=cost,
    )(x, fp["w_slab"], fp["v_slab"])

    return {
        "logits": packed[0],
        "main_logits": packed[1],
        "ensemble_logits": packed[2],
    }


def fold_params(p):
    """Offline folding/packing of per-module params into the two kernel slabs."""
    f32 = jnp.float32

    # attention value+output projections folded: W_vo = Wv @ Wo, b_vo = bv @ Wo + bo
    w_vo = jnp.dot(p["wv"].astype(f32), p["wo"].astype(f32))
    b_vo = jnp.dot(p["bv"].astype(f32), p["wo"].astype(f32)) + p["bo"]          # (1, 128)

    # topology head + ensemble layer-1 stacked column-wise: (32, 2+3*16) = (32, 50)
    ew1_s = jnp.concatenate([p["ew1"][i] for i in range(NUM_ENSEMBLE)], axis=-1)  # (32, 48)
    head_w = jnp.concatenate([p["tw"], ew1_s], axis=-1)                           # (32, 50)
    head_b = jnp.concatenate([p["tb"].reshape(-1), p["eb1"].reshape(-1)])         # (50,)

    # ensemble layer-2 stacked row-wise; equal-weight average -> sum of biases (div by 3 in-kernel)
    ew2_s = jnp.concatenate([p["ew2"][i] for i in range(NUM_ENSEMBLE)], axis=0)   # (48, 2)
    eb2_sum = jnp.sum(p["eb2"], axis=0)                                           # (2,)

    # ---- bf16 weight slab -----------------------------------------------------------
    W = jnp.zeros((W_SLAB_ROWS, 128), f32)
    W = W.at[W_VO_R0:W_VO_R1, 0:D_MODEL].set(w_vo)
    W = W.at[W_F0_R0:W_F0_R1, 0:FUSION_HIDDEN[0]].set(p["fw0"])
    W = W.at[W_F1_R0:W_F1_R1, 0:FUSION_HIDDEN[1]].set(p["fw1"])
    W = W.at[W_HD_R0:W_HD_R1, 0:HEAD_WIDTH].set(head_w)
    W = W.at[W_E2_R0:W_E2_R1, 0:NUM_CLASSES].set(ew2_s)

    # ---- f32 vector slab (one row per bias/gamma/beta) -------------------------------
    V = jnp.zeros((V_SLAB_ROWS, 128), f32)
    V = V.at[V_BVO, 0:D_MODEL].set(b_vo.reshape(-1))
    V = V.at[V_GA, 0:D_MODEL].set(p["attn_ln_g"].reshape(-1))
    V = V.at[V_BA, 0:D_MODEL].set(p["attn_ln_b"].reshape(-1))
    V = V.at[V_FB0, 0:FUSION_HIDDEN[0]].set(p["fb0"].reshape(-1))
    V = V.at[V_FG0, 0:FUSION_HIDDEN[0]].set(p["fg0"].reshape(-1))
    V = V.at[V_FBT0, 0:FUSION_HIDDEN[0]].set(p["fbt0"].reshape(-1))
    V = V.at[V_FB1, 0:FUSION_HIDDEN[1]].set(p["fb1"].reshape(-1))
    V = V.at[V_FG1, 0:FUSION_HIDDEN[1]].set(p["fg1"].reshape(-1))
    V = V.at[V_FBT1, 0:FUSION_HIDDEN[1]].set(p["fbt1"].reshape(-1))
    V = V.at[V_HB, 0:HEAD_WIDTH].set(head_b)
    V = V.at[V_EB2, 0:NUM_CLASSES].set(eb2_sum)

    return {"w_slab": W.astype(jnp.bfloat16), "v_slab": V}


def init_params(key):
    ks = iter(jax.random.split(key, 64))

    def w(shape, scale=0.05):
        return (scale * jax.random.normal(next(ks), shape)).astype(jnp.float32)

    def zeros(shape):
        return jnp.zeros(shape, jnp.float32)

    def ones(shape):
        return jnp.ones(shape, jnp.float32)

    p = {}
    # MultiHeadAttention: wq/bq/wk/bk are provably dead for seq_len==1 (softmax==1),
    # so only the value/output projections influence the forward pass.
    p["wv"] = w((D_MODEL, D_MODEL))
    p["bv"] = zeros((1, D_MODEL))
    p["wo"] = w((D_MODEL, D_MODEL))
    p["bo"] = zeros((1, D_MODEL))
    p["attn_ln_g"] = ones((1, D_MODEL))
    p["attn_ln_b"] = zeros((1, D_MODEL))
    # fusion network
    p["fw0"] = w((D_MODEL, FUSION_HIDDEN[0]))
    p["fb0"] = zeros((1, FUSION_HIDDEN[0]))
    p["fg0"] = ones((1, FUSION_HIDDEN[0]))
    p["fbt0"] = zeros((1, FUSION_HIDDEN[0]))
    p["fw1"] = w((FUSION_HIDDEN[0], FUSION_HIDDEN[1]))
    p["fb1"] = zeros((1, FUSION_HIDDEN[1]))
    p["fg1"] = ones((1, FUSION_HIDDEN[1]))
    p["fbt1"] = zeros((1, FUSION_HIDDEN[1]))
    # topology head
    p["tw"] = w((FUSION_HIDDEN[1], NUM_CLASSES))
    p["tb"] = zeros((1, NUM_CLASSES))
    # ensemble heads (per-head; packed offline)
    p["ew1"] = w((NUM_ENSEMBLE, FUSION_HIDDEN[1], ENS_HIDDEN))
    p["eb1"] = zeros((NUM_ENSEMBLE, ENS_HIDDEN))
    p["ew2"] = w((NUM_ENSEMBLE, ENS_HIDDEN, NUM_CLASSES))
    p["eb2"] = zeros((NUM_ENSEMBLE, NUM_CLASSES))
    return p


if __name__ == "__main__":
    key = jax.random.PRNGKey(0)
    k_emb, k_par = jax.random.split(key)
    ke = jax.random.split(k_emb, 5)

    # modality embeddings (outputs of the external GNN/FFNN encoders)
    embeddings = {
        "crystal_emb": jax.random.normal(ke[0], (B, CRYSTAL_DIM), jnp.float32),
        "kspace_emb":  jax.random.normal(ke[1], (B, KSPACE_DIM), jnp.float32),
        "scalar_emb":  jax.random.normal(ke[2], (B, SCALAR_DIM), jnp.float32),
        "phys_emb":    jax.random.normal(ke[3], (B, PHYS_DIM), jnp.float32),
        "spec_emb":    jax.random.normal(ke[4], (B, SPEC_DIM), jnp.float32),
    }
    params = init_params(k_par)
    folded = fold_params(params)          # one-time offline weight folding / slab packing

    out = enhanced_classifier_forward(embeddings, folded)
    jax.block_until_ready(out)

    assert out["logits"].shape == (B, NUM_CLASSES)
    assert out["main_logits"].shape == (B, NUM_CLASSES)
    assert out["ensemble_logits"].shape == (B, NUM_CLASSES)
    assert bool(jnp.all(jnp.isfinite(out["logits"])))
    print("KERNEL_OK")
</pallas_src>

<mosaic_0001>
module attributes {stable_mosaic.version = 11 : i64} {
  func.func @classifier_kernel(%arg0: memref<2x128xf32, #tpu.memory_space<vmem>>, %arg1: memref<400x128xbf16, #tpu.memory_space<vmem>>, %arg2: memref<16x128xf32, #tpu.memory_space<vmem>>, %arg3: memref<3x2x2xf32, #tpu.memory_space<vmem>>) attributes {dimension_semantics = [], scalar_prefetch = 0 : i64, scratch_operands = 0 : i64, tpu.core_type = #tpu.core_type<tc>} {
    %c0 = arith.constant 0 : index
    %c0_0 = arith.constant 0 : index
    %0 = vector.load %arg0[%c0, %c0_0] : memref<2x128xf32, #tpu.memory_space<vmem>>, vector<2x128xf32>
    %cst = arith.constant dense<0.000000e+00> : vector<2xf32>
    %1 = vector.multi_reduction <add>, %0, %cst [1] : vector<2x128xf32> to vector<2xf32>
    %2 = vector.shape_cast %1 : vector<2xf32> to vector<2x1xf32>
    %cst_1 = arith.constant 1.280000e+02 : f32
    %3 = vector.broadcast %cst_1 : f32 to vector<2x1xf32>
    %4 = arith.divf %2, %3 : vector<2x1xf32>
    %5 = arith.mulf %0, %0 : vector<2x128xf32>
    %cst_2 = arith.constant dense<0.000000e+00> : vector<2xf32>
    %6 = vector.multi_reduction <add>, %5, %cst_2 [1] : vector<2x128xf32> to vector<2xf32>
    %7 = vector.shape_cast %6 : vector<2xf32> to vector<2x1xf32>
    %cst_3 = arith.constant 1.280000e+02 : f32
    %8 = vector.broadcast %cst_3 : f32 to vector<2x1xf32>
    %9 = arith.divf %7, %8 : vector<2x1xf32>
    %10 = arith.mulf %4, %4 : vector<2x1xf32>
    %11 = arith.subf %9, %10 : vector<2x1xf32>
    %12 = vector.broadcast %4 : vector<2x1xf32> to vector<2x128xf32>
    %13 = arith.subf %0, %12 : vector<2x128xf32>
    %cst_4 = arith.constant 9.99999974E-6 : f32
    %14 = vector.broadcast %cst_4 : f32 to vector<2x1xf32>
    %15 = arith.addf %11, %14 : vector<2x1xf32>
    %16 = math.rsqrt %15 : vector<2x1xf32>
    %17 = vector.broadcast %16 : vector<2x1xf32> to vector<2x128xf32>
    %18 = arith.mulf %13, %17 : vector<2x128xf32>
    %19 = arith.truncf %18 : vector<2x128xf32> to vector<2x128xbf16>
    %c0_5 = arith.constant 0 : index
    %c0_6 = arith.constant 0 : index
    %20 = vector.load %arg1[%c0_5, %c0_6] : memref<400x128xbf16, #tpu.memory_space<vmem>>, vector<128x128xbf16>
    %cst_7 = arith.constant dense<0.000000e+00> : vector<2x128xf32>
    %21 = tpu.matmul %19, %20, %cst_7 {dimension_numbers = #tpu.dot_dimension_numbers<[1], [0], [0], [1], [0, 0, 1, 1], [], []>} : vector<2x128xbf16>, vector<128x128xbf16>, vector<2x128xf32> -> vector<2x128xf32>
    %c0_8 = arith.constant 0 : index
    %c0_9 = arith.constant 0 : index
    %22 = vector.load %arg2[%c0_8, %c0_9] : memref<16x128xf32, #tpu.memory_space<vmem>>, vector<1x128xf32>
    %23 = vector.broadcast %22 : vector<1x128xf32> to vector<2x128xf32>
    %24 = arith.addf %21, %23 : vector<2x128xf32>
    %25 = arith.addf %18, %24 : vector<2x128xf32>
    %c1 = arith.constant 1 : index
    %c0_10 = arith.constant 0 : index
    %26 = vector.load %arg2[%c1, %c0_10] : memref<16x128xf32, #tpu.memory_space<vmem>>, vector<1x128xf32>
    %c2 = arith.constant 2 : index
    %c0_11 = arith.constant 0 : index
    %27 = vector.load %arg2[%c2, %c0_11] : memref<16x128xf32, #tpu.memory_space<vmem>>, vector<1x128xf32>
    %cst_12 = arith.constant dense<0.000000e+00> : vector<2xf32>
    %28 = vector.multi_reduction <add>, %25, %cst_12 [1] : vector<2x128xf32> to vector<2xf32>
    %29 = vector.shape_cast %28 : vector<2xf32> to vector<2x1xf32>
    %cst_13 = arith.constant 1.280000e+02 : f32
    %30 = vector.broadcast %cst_13 : f32 to vector<2x1xf32>
    %31 = arith.divf %29, %30 : vector<2x1xf32>
    %32 = arith.mulf %25, %25 : vector<2x128xf32>
    %cst_14 = arith.constant dense<0.000000e+00> : vector<2xf32>
    %33 = vector.multi_reduction <add>, %32, %cst_14 [1] : vector<2x128xf32> to vector<2xf32>
    %34 = vector.shape_cast %33 : vector<2xf32> to vector<2x1xf32>
    %cst_15 = arith.constant 1.280000e+02 : f32
    %35 = vector.broadcast %cst_15 : f32 to vector<2x1xf32>
    %36 = arith.divf %34, %35 : vector<2x1xf32>
    %37 = arith.mulf %31, %31 : vector<2x1xf32>
    %38 = arith.subf %36, %37 : vector<2x1xf32>
    %39 = vector.broadcast %31 : vector<2x1xf32> to vector<2x128xf32>
    %40 = arith.subf %25, %39 : vector<2x128xf32>
    %cst_16 = arith.constant 9.99999974E-6 : f32
    %41 = vector.broadcast %cst_16 : f32 to vector<2x1xf32>
    %42 = arith.addf %38, %41 : vector<2x1xf32>
    %43 = math.rsqrt %42 : vector<2x1xf32>
    %44 = vector.broadcast %43 : vector<2x1xf32> to vector<2x128xf32>
    %45 = arith.mulf %40, %44 : vector<2x128xf32>
    %46 = vector.broadcast %26 : vector<1x128xf32> to vector<2x128xf32>
    %47 = arith.mulf %45, %46 : vector<2x128xf32>
    %48 = vector.broadcast %27 : vector<1x128xf32> to vector<2x128xf32>
    %49 = arith.addf %47, %48 : vector<2x128xf32>
    %50 = arith.truncf %49 : vector<2x128xf32> to vector<2x128xbf16>
    %c128 = arith.constant 128 : index
    %c0_17 = arith.constant 0 : index
    %51 = vector.load %arg1[%c128, %c0_17] : memref<400x128xbf16, #tpu.memory_space<vmem>>, vector<128x64xbf16>
    %cst_18 = arith.constant dense<0.000000e+00> : vector<2x64xf32>
    %52 = tpu.matmul %50, %51, %cst_18 {dimension_numbers = #tpu.dot_dimension_numbers<[1], [0], [0], [1], [0, 0, 1, 1], [], []>} : vector<2x128xbf16>, vector<128x64xbf16>, vector<2x64xf32> -> vector<2x64xf32>
    %c3 = arith.constant 3 : index
    %c0_19 = arith.constant 0 : index
    %53 = vector.load %arg2[%c3, %c0_19] : memref<16x128xf32, #tpu.memory_space<vmem>>, vector<1x64xf32>
    %54 = vector.broadcast %53 : vector<1x64xf32> to vector<2x64xf32>
    %55 = arith.addf %52, %54 : vector<2x64xf32>
    %c4 = arith.constant 4 : index
    %c0_20 = arith.constant 0 : index
    %56 = vector.load %arg2[%c4, %c0_20] : memref<16x128xf32, #tpu.memory_space<vmem>>, vector<1x64xf32>
    %c5 = arith.constant 5 : index
    %c0_21 = arith.constant 0 : index
    %57 = vector.load %arg2[%c5, %c0_21] : memref<16x128xf32, #tpu.memory_space<vmem>>, vector<1x64xf32>
    %cst_22 = arith.constant dense<0.000000e+00> : vector<2xf32>
    %58 = vector.multi_reduction <add>, %55, %cst_22 [1] : vector<2x64xf32> to vector<2xf32>
    %59 = vector.shape_cast %58 : vector<2xf32> to vector<2x1xf32>
    %cst_23 = arith.constant 6.400000e+01 : f32
    %60 = vector.broadcast %cst_23 : f32 to vector<2x1xf32>
    %61 = arith.divf %59, %60 : vector<2x1xf32>
    %62 = arith.mulf %55, %55 : vector<2x64xf32>
    %cst_24 = arith.constant dense<0.000000e+00> : vector<2xf32>
    %63 = vector.multi_reduction <add>, %62, %cst_24 [1] : vector<2x64xf32> to vector<2xf32>
    %64 = vector.shape_cast %63 : vector<2xf32> to vector<2x1xf32>
    %cst_25 = arith.constant 6.400000e+01 : f32
    %65 = vector.broadcast %cst_25 : f32 to vector<2x1xf32>
    %66 = arith.divf %64, %65 : vector<2x1xf32>
    %67 = arith.mulf %61, %61 : vector<2x1xf32>
    %68 = arith.subf %66, %67 : vector<2x1xf32>
    %69 = vector.broadcast %61 : vector<2x1xf32> to vector<2x64xf32>
    %70 = arith.subf %55, %69 : vector<2x64xf32>
    %cst_26 = arith.constant 9.99999974E-6 : f32
    %71 = vector.broadcast %cst_26 : f32 to vector<2x1xf32>
    %72 = arith.addf %68, %71 : vector<2x1xf32>
    %73 = math.rsqrt %72 : vector<2x1xf32>
    %74 = vector.broadcast %73 : vector<2x1xf32> to vector<2x64xf32>
    %75 = arith.mulf %70, %74 : vector<2x64xf32>
    %76 = vector.broadcast %56 : vector<1x64xf32> to vector<2x64xf32>
    %77 = arith.mulf %75, %76 : vector<2x64xf32>
    %78 = vector.broadcast %57 : vector<1x64xf32> to vector<2x64xf32>
    %79 = arith.addf %77, %78 : vector<2x64xf32>
    %cst_27 = arith.constant 0.000000e+00 : f32
    %80 = vector.broadcast %cst_27 : f32 to vector<2x64xf32>
    %81 = arith.maximumf %79, %80 : vector<2x64xf32>
    %82 = arith.truncf %81 : vector<2x64xf32> to vector<2x64xbf16>
    %c256 = arith.constant 256 : index
    %c0_28 = arith.constant 0 : index
    %83 = vector.load %arg1[%c256, %c0_28] : memref<400x128xbf16, #tpu.memory_space<vmem>>, vector<64x32xbf16>
    %cst_29 = arith.constant dense<0.000000e+00> : vector<2x32xf32>
    %84 = tpu.matmul %82, %83, %cst_29 {dimension_numbers = #tpu.dot_dimension_numbers<[1], [0], [0], [1], [0, 0, 1, 1], [], []>} : vector<2x64xbf16>, vector<64x32xbf16>, vector<2x32xf32> -> vector<2x32xf32>
    %c6 = arith.constant 6 : index
    %c0_30 = arith.constant 0 : index
    %85 = vector.load %arg2[%c6, %c0_30] : memref<16x128xf32, #tpu.memory_space<vmem>>, vector<1x32xf32>
    %86 = vector.broadcast %85 : vector<1x32xf32> to vector<2x32xf32>
    %87 = arith.addf %84, %86 : vector<2x32xf32>
    %c7 = arith.constant 7 : index
    %c0_31 = arith.constant 0 : index
    %88 = vector.load %arg2[%c7, %c0_31] : memref<16x128xf32, #tpu.memory_space<vmem>>, vector<1x32xf32>
    %c8 = arith.constant 8 : index
    %c0_32 = arith.constant 0 : index
    %89 = vector.load %arg2[%c8, %c0_32] : memref<16x128xf32, #tpu.memory_space<vmem>>, vector<1x32xf32>
    %cst_33 = arith.constant dense<0.000000e+00> : vector<2xf32>
    %90 = vector.multi_reduction <add>, %87, %cst_33 [1] : vector<2x32xf32> to vector<2xf32>
    %91 = vector.shape_cast %90 : vector<2xf32> to vector<2x1xf32>
    %cst_34 = arith.constant 3.200000e+01 : f32
    %92 = vector.broadcast %cst_34 : f32 to vector<2x1xf32>
    %93 = arith.divf %91, %92 : vector<2x1xf32>
    %94 = arith.mulf %87, %87 : vector<2x32xf32>
    %cst_35 = arith.constant dense<0.000000e+00> : vector<2xf32>
    %95 = vector.multi_reduction <add>, %94, %cst_35 [1] : vector<2x32xf32> to vector<2xf32>
    %96 = vector.shape_cast %95 : vector<2xf32> to vector<2x1xf32>
    %cst_36 = arith.constant 3.200000e+01 : f32
    %97 = vector.broadcast %cst_36 : f32 to vector<2x1xf32>
    %98 = arith.divf %96, %97 : vector<2x1xf32>
    %99 = arith.mulf %93, %93 : vector<2x1xf32>
    %100 = arith.subf %98, %99 : vector<2x1xf32>
    %101 = vector.broadcast %93 : vector<2x1xf32> to vector<2x32xf32>
    %102 = arith.subf %87, %101 : vector<2x32xf32>
    %cst_37 = arith.constant 9.99999974E-6 : f32
    %103 = vector.broadcast %cst_37 : f32 to vector<2x1xf32>
    %104 = arith.addf %100, %103 : vector<2x1xf32>
    %105 = math.rsqrt %104 : vector<2x1xf32>
    %106 = vector.broadcast %105 : vector<2x1xf32> to vector<2x32xf32>
    %107 = arith.mulf %102, %106 : vector<2x32xf32>
    %108 = vector.broadcast %88 : vector<1x32xf32> to vector<2x32xf32>
    %109 = arith.mulf %107, %108 : vector<2x32xf32>
    %110 = vector.broadcast %89 : vector<1x32xf32> to vector<2x32xf32>
    %111 = arith.addf %109, %110 : vector<2x32xf32>
    %cst_38 = arith.constant 0.000000e+00 : f32
    %112 = vector.broadcast %cst_38 : f32 to vector<2x32xf32>
    %113 = arith.maximumf %111, %112 : vector<2x32xf32>
    %cst_39 = arith.constant -1.000000e+01 : f32
    %cst_40 = arith.constant 1.000000e+01 : f32
    %114 = vector.broadcast %cst_39 : f32 to vector<2x32xf32>
    %115 = arith.maximumf %114, %113 : vector<2x32xf32>
    %116 = vector.broadcast %cst_40 : f32 to vector<2x32xf32>
    %117 = arith.minimumf %116, %115 : vector<2x32xf32>
    %118 = arith.truncf %117 : vector<2x32xf32> to vector<2x32xbf16>
    %c320 = arith.constant 320 : index
    %c0_41 = arith.constant 0 : index
    %119 = vector.load %arg1[%c320, %c0_41] : memref<400x128xbf16, #tpu.memory_space<vmem>>, vector<32x50xbf16>
    %cst_42 = arith.constant dense<0.000000e+00> : vector<2x50xf32>
    %120 = tpu.matmul %118, %119, %cst_42 {dimension_numbers = #tpu.dot_dimension_numbers<[1], [0], [0], [1], [0, 0, 1, 1], [], []>} : vector<2x32xbf16>, vector<32x50xbf16>, vector<2x50xf32> -> vector<2x50xf32>
    %c9 = arith.constant 9 : index
    %c0_43 = arith.constant 0 : index
    %121 = vector.load %arg2[%c9, %c0_43] : memref<16x128xf32, #tpu.memory_space<vmem>>, vector<1x50xf32>
    %122 = vector.broadcast %121 : vector<1x50xf32> to vector<2x50xf32>
    %123 = arith.addf %120, %122 : vector<2x50xf32>
    %124 = vector.extract_strided_slice %123 {offsets = [0, 0], sizes = [2, 2], strides = [1, 1]} : vector<2x50xf32> to vector<2x2xf32>
    %125 = vector.extract_strided_slice %123 {offsets = [0, 2], sizes = [2, 48], strides = [1, 1]} : vector<2x50xf32> to vector<2x48xf32>
    %cst_44 = arith.constant 0.000000e+00 : f32
    %126 = vector.broadcast %cst_44 : f32 to vector<2x48xf32>
    %127 = arith.maximumf %125, %126 : vector<2x48xf32>
    %128 = arith.truncf %127 : vector<2x48xf32> to vector<2x48xbf16>
    %c352 = arith.constant 352 : index
    %c0_45 = arith.constant 0 : index
    %129 = vector.load %arg1[%c352, %c0_45] : memref<400x128xbf16, #tpu.memory_space<vmem>>, vector<48x2xbf16>
    %cst_46 = arith.constant dense<0.000000e+00> : vector<2x2xf32>
    %130 = tpu.matmul %128, %129, %cst_46 {dimension_numbers = #tpu.dot_dimension_numbers<[1], [0], [0], [1], [0, 0, 1, 1], [], []>} : vector<2x48xbf16>, vector<48x2xbf16>, vector<2x2xf32> -> vector<2x2xf32>
    %c10 = arith.constant 10 : index
    %c0_47 = arith.constant 0 : index
    %131 = vector.load %arg2[%c10, %c0_47] : memref<16x128xf32, #tpu.memory_space<vmem>>, vector<1x2xf32>
    %132 = vector.broadcast %131 : vector<1x2xf32> to vector<2x2xf32>
    %133 = arith.addf %130, %132 : vector<2x2xf32>
    %cst_48 = arith.constant 0.333333343 : f32
    %134 = vector.broadcast %cst_48 : f32 to vector<2x2xf32>
    %135 = arith.mulf %133, %134 : vector<2x2xf32>
    %cst_49 = arith.constant 0.699999988 : f32
    %136 = vector.broadcast %cst_49 : f32 to vector<2x2xf32>
    %137 = arith.mulf %136, %124 : vector<2x2xf32>
    %cst_50 = arith.constant 3.000000e-01 : f32
    %138 = vector.broadcast %cst_50 : f32 to vector<2x2xf32>
    %139 = arith.mulf %138, %135 : vector<2x2xf32>
    %140 = arith.addf %137, %139 : vector<2x2xf32>
    %c0_51 = arith.constant 0 : index
    %c0_52 = arith.constant 0 : index
    %c0_53 = arith.constant 0 : index
    %141 = vector.load %arg3[%c0_51, %c0_52, %c0_53] : memref<3x2x2xf32, #tpu.memory_space<vmem>>, vector<1x2x2xf32>
    %142 = vector.shape_cast %141 : vector<1x2x2xf32> to vector<2x2xf32>
    %143 = vector.shape_cast %140 : vector<2x2xf32> to vector<1x2x2xf32>
    tpu.vector_store %arg3[%c0_51, %c0_52, %c0_53], %143 {strides = array<i32>} : memref<3x2x2xf32, #tpu.memory_space<vmem>>, vector<1x2x2xf32>,
    %c1_54 = arith.constant 1 : index
    %c0_55 = arith.constant 0 : index
    %c0_56 = arith.constant 0 : index
    %144 = vector.load %arg3[%c1_54, %c0_55, %c0_56] : memref<3x2x2xf32, #tpu.memory_space<vmem>>, vector<1x2x2xf32>
    %145 = vector.shape_cast %144 : vector<1x2x2xf32> to vector<2x2xf32>
    %146 = vector.shape_cast %124 : vector<2x2xf32> to vector<1x2x2xf32>
    tpu.vector_store %arg3[%c1_54, %c0_55, %c0_56], %146 {strides = array<i32>} : memref<3x2x2xf32, #tpu.memory_space<vmem>>, vector<1x2x2xf32>,
    %c2_57 = arith.constant 2 : index
    %c0_58 = arith.constant 0 : index
    %c0_59 = arith.constant 0 : index
    %147 = vector.load %arg3[%c2_57, %c0_58, %c0_59] : memref<3x2x2xf32, #tpu.memory_space<vmem>>, vector<1x2x2xf32>
    %148 = vector.shape_cast %147 : vector<1x2x2xf32> to vector<2x2xf32>
    %149 = vector.shape_cast %135 : vector<2x2xf32> to vector<1x2x2xf32>
    tpu.vector_store %arg3[%c2_57, %c0_58, %c0_59], %149 {strides = array<i32>} : memref<3x2x2xf32, #tpu.memory_space<vmem>>, vector<1x2x2xf32>,
    return
  }
}

</mosaic_0001>

<llo_original>
// kernel: tpu_custom_call.1
$region0: #{tpu_custom_call.1}
  #allocation0 [shape = 'u32[]', space=smem, size = 0x4, offset = 0x4, fixed_abs, tag = 'smem constant byte address 0x4 - core index']
  #allocation1 [shape = 'u32[72,128]{1,0:T(1,128)}', space=vmem, size = 0x9000, scoped, tag = 'internal scratch']
  %s0 = inlined_call_operand.hbm [shape: f32[2,128], index: 0, kind: input, shape index: {}]
  %s1 = inlined_call_operand.hbm [shape: bf16[400,128], index: 1, kind: input, shape index: {}]
  %s2 = inlined_call_operand.hbm [shape: f32[16,128], index: 2, kind: input, shape index: {}]
  %s3 = inlined_call_operand.vmem [shape: f32[3,2,2], index: 3, kind: output, shape index: {}]
  %s4 = sld [smem:[#allocation0]]
  $region34: #{tpu_custom_call.1} parent=0
    _
  %s6 = ssub.s32 1, %s4
  %s7 = scalar_select 0, %s6, %s4
  $region1: #{tpu_custom_call.1} parent=0
    #allocation2 [shape = 'u8[1024]{0}', space=vmem, size = 0x400, scoped, tag = 'input window, operand 0, single buffered']
    #allocation3 [shape = 's32[1]{0}', space=sflag, size = 0x4, scoped, tag = 'scoped memory for tpu_custom_call.1']
    #allocation4 [shape = 'u8[102400]{0}', space=vmem, size = 0x19000, scoped, tag = 'input window, operand 1, single buffered']
    #allocation5 [shape = 's32[1]{0}', space=sflag, size = 0x4, scoped, tag = 'scoped memory for tpu_custom_call.1']
    #allocation6 [shape = 'u8[8192]{0}', space=vmem, size = 0x2000, scoped, tag = 'input window, operand 2, single buffered']
    %8 = vsyncpa [#allocation3], 0
    %9 = vsyncpa [#allocation5], 0
    // Predicated region
    $region2: #{tpu_custom_call.1} parent=1 // pred_check
      _
    $region3: #{tpu_custom_call.1} parent=1 // pred_check_branch
      %11 = sbr.rel (0) target = $region5
    $region4: #{tpu_custom_call.1} parent=1 // pred_region
      %13 = vsyncadd [#allocation3], 0
      %s15 = sshll.u32 %s0, 4
      %s16 = int_to_ptr.hbm [resolvable:$true] %s15
      %s17 = sshll.u32 [#allocation2], 4
      %s18 = int_to_ptr.vmem [resolvable:$true] %s17
      %20 = dma.hbm_to_vmem [thread:$0]  %s16, 32, %s18, [#allocation3]
    $region5: #{tpu_custom_call.1} parent=1 // pred_fallthru
      _
    // Predicated region
    $region6: #{tpu_custom_call.1} parent=1 // pred_check
      _
    $region7: #{tpu_custom_call.1} parent=1 // pred_check_branch
      %22 = sbr.rel (0) target = $region9
    $region8: #{tpu_custom_call.1} parent=1 // pred_region
      %24 = vsyncadd [#allocation5], 0
      %s25 = sshll.u32 %s1, 4
      %s26 = int_to_ptr.hbm [resolvable:$true] %s25
      %s27 = sshll.u32 [#allocation4], 4
      %s28 = int_to_ptr.vmem [resolvable:$true] %s27
      %33 = dma.hbm_to_vmem [thread:$0]  %s26, 3200, %s28, [#allocation5], 64, 64, 4
    $region9: #{tpu_custom_call.1} parent=1 // pred_fallthru
      _
    // Predicated region
    $region10: #{tpu_custom_call.1} parent=1 // pred_check
      _
    $region11: #{tpu_custom_call.1} parent=1 // pred_check_branch
      %35 = sbr.rel (0) target = $region13
    $region12: #{tpu_custom_call.1} parent=1 // pred_region
      %37 = vsyncadd [#allocation5], 0
      %s38 = sshll.u32 %s2, 4
      %s39 = int_to_ptr.hbm [resolvable:$true] %s38
      %s40 = sshll.u32 [#allocation6], 4
      %s41 = int_to_ptr.vmem [resolvable:$true] %s40
      %46 = dma.hbm_to_vmem [thread:$0]  %s39, 256, %s41, [#allocation5], 128, 128, 8
    $region13: #{tpu_custom_call.1} parent=1 // pred_fallthru
      _
    // Predicated region
    $region14: #{tpu_custom_call.1} parent=1 // pred_check
      _
    $region15: #{tpu_custom_call.1} parent=1 // pred_check_branch
      %48 = sbr.rel (0) target = $region17
    $region16: #{tpu_custom_call.1} parent=1 // pred_region
      %50 = dma.done [#allocation3], 32
    $region17: #{tpu_custom_call.1} parent=1 // pred_fallthru
      _
    // Predicated region
    $region18: #{tpu_custom_call.1} parent=1 // pred_check
      _
    $region19: #{tpu_custom_call.1} parent=1 // pred_check_branch
      %52 = sbr.rel (0) target = $region21
    $region20: #{tpu_custom_call.1} parent=1 // pred_region
      %54 = dma.done [#allocation5], 3200
    $region21: #{tpu_custom_call.1} parent=1 // pred_fallthru
      _
    // Predicated region
    $region22: #{tpu_custom_call.1} parent=1 // pred_check
      _
    $region23: #{tpu_custom_call.1} parent=1 // pred_check_branch
      %56 = sbr.rel (0) target = $region25
    $region24: #{tpu_custom_call.1} parent=1 // pred_region
      %58 = dma.done [#allocation5], 256
    $region25: #{tpu_custom_call.1} parent=1 // pred_fallthru
      _
    %v60 = vld [vmem:[#allocation2] sm:$0x3]
    %vm61 = vcmask 1041408
    %v62 = vsel %vm61, %v60, 0.0
    %63 = vadd.xlane.f32.xlu0 %v62
    %v64 = vpop.xlane.xlu0 %63
    %v65 = vrcp.pop 128.0
    %v66 = vmul.f32 128.0, %v65
    %v67 = vsub.f32 1.0, %v66
    %v68 = vmul.f32 %v65, %v67
    %v69 = vadd.f32 %v65, %v68
    %vm70 = vweird.f32 %v65
    %v71 = vsel %vm70, %v65, %v69
    %v72 = vmul.f32 %v64, %v71
    %v73 = vmul.f32 %v60, %v60
    %v74 = vsel %vm61, %v73, 0.0
    %75 = vadd.xlane.f32.xlu0 %v74
    %v76 = vpop.xlane.xlu0 %75
    %v77 = vmul.f32 %v76, %v71
    %v78 = vmul.f32 %v72, %v72
    %v79 = vsub.f32 %v77, %v78
    %v80 = vsub.f32 %v60, %v72
    %v81 = vadd.f32 %v79, 1e-05
    %v82 = vrsqrt.pop %v81
    %v83 = vmul.f32 %v82, %v81
    %v84 = vmul.f32 %v83, %v82
    %v85 = vmul.f32 0.5, %v84
    %v86 = vsub.f32 1.5, %v85
    %v87 = vmul.f32 %v82, %v86
    %vm88 = vweird.f32 %v81
    %vm89 = vweird.f32 %v82
    %vm90 = vmor %vm88, %vm89
    %v91 = vsel %vm90, %v82, %v87
    %v92 = vmul.f32 %v80, %v91
    %v93 = vpack.c.bf16 %v92, %v92
    %v94 = vld [vmem:[#allocation4] sm:$0xf]
    %v95 = vld [vmem:[#allocation4 + $0x4] sm:$0xf]
    %v96 = vld [vmem:[#allocation4 + $0x8] sm:$0xf]
    %v97 = vld [vmem:[#allocation4 + $0xc] sm:$0xf]
    %v98 = vld [vmem:[#allocation4 + $0x10] sm:$0xf]
    %v99 = vld [vmem:[#allocation4 + $0x14] sm:$0xf]
    %v100 = vld [vmem:[#allocation4 + $0x18] sm:$0xf]
    %v101 = vld [vmem:[#allocation4 + $0x1c] sm:$0xf]
    %v102 = vld [vmem:[#allocation4 + $0x20] sm:$0xf]
    %v103 = vld [vmem:[#allocation4 + $0x24] sm:$0xf]
    %v104 = vld [vmem:[#allocation4 + $0x28] sm:$0xf]
    %v105 = vld [vmem:[#allocation4 + $0x2c] sm:$0xf]
    %v106 = vld [vmem:[#allocation4 + $0x30] sm:$0xf]
    %v107 = vld [vmem:[#allocation4 + $0x34] sm:$0xf]
    %v108 = vld [vmem:[#allocation4 + $0x38] sm:$0xf]
    %v109 = vld [vmem:[#allocation4 + $0x3c] sm:$0xf]
    %v110 = vld [vmem:[#allocation6] sm:$0x1]
    %v111 = vperm.slane %v110, 0
    %v128 = vunpack.c.l.b16 %v94
    %v129 = vunpack.c.l.b16 %v95
    %v130 = vunpack.c.l.b16 %v96
    %v131 = vunpack.c.l.b16 %v97
    %v132 = vunpack.c.l.b16 %v98
    %v133 = vunpack.c.l.b16 %v99
    %v134 = vunpack.c.l.b16 %v100
    %v135 = vunpack.c.l.b16 %v101
    %v136 = vunpack.c.l.b16 %v102
    %v137 = vunpack.c.l.b16 %v103
    %v138 = vunpack.c.l.b16 %v104
    %v139 = vunpack.c.l.b16 %v105
    %v140 = vunpack.c.l.b16 %v106
    %v141 = vunpack.c.l.b16 %v107
    %v142 = vunpack.c.l.b16 %v108
    %v143 = vunpack.c.l.b16 %v109
    %v144 = vpack.c.b16 %v129, %v128
    %v145 = vpack.c.b16 %v131, %v130
    %v146 = vpack.c.b16 %v133, %v132
    %v147 = vpack.c.b16 %v135, %v134
    %v148 = vpack.c.b16 %v137, %v136
    %v149 = vpack.c.b16 %v139, %v138
    %v150 = vpack.c.b16 %v141, %v140
    %v151 = vpack.c.b16 %v143, %v142
    %160 = vmatpush.bf16.msra.mxu0 %v151
    %161 = vmatpush.bf16.msra.mxu0 %v150
    %162 = vmatpush.bf16.msra.mxu0 %v149
    %163 = vmatpush.bf16.msra.mxu0 %v148
    %164 = vmatpush.bf16.msra.mxu0 %v147
    %165 = vmatpush.bf16.msra.mxu0 %v146
    %166 = vmatpush.bf16.msra.mxu0 %v145
    %167 = vmatpush.bf16.msra.mxu0 %v144
    %168 = vmatmul.bf16.gmra.mxu0 %v93
    %v169 = vpop.f32.mrf.mxu0
    %v170 = vadd.f32 %v111, %v169
    %v171 = vpop.f32.mrf.mxu0
    %172 = vdwg.mxu0
    %v173 = vadd.f32 %v92, %v170
    %v174 = vld [vmem:[#allocation6 + $0x1] sm:$0x1]
    %v175 = vld [vmem:[#allocation6 + $0x2] sm:$0x1]
    %v176 = vsel %vm61, %v173, 0.0
    %177 = vadd.xlane.f32.xlu0 %v176
    %v178 = vpop.xlane.xlu0 %177
    %v179 = vmul.f32 %v178, %v71
    %v180 = vmul.f32 %v173, %v173
    %v181 = vsel %vm61, %v180, 0.0
    %182 = vadd.xlane.f32.xlu0 %v181
    %v183 = vpop.xlane.xlu0 %182
    %v184 = vmul.f32 %v183, %v71
    %v185 = vmul.f32 %v179, %v179
    %v186 = vsub.f32 %v184, %v185
    %v187 = vsub.f32 %v173, %v179
    %v188 = vadd.f32 %v186, 1e-05
    %v189 = vrsqrt.pop %v188
    %v190 = vmul.f32 %v189, %v188
    %v191 = vmul.f32 %v190, %v189
    %v192 = vmul.f32 0.5, %v191
    %v193 = vsub.f32 1.5, %v192
    %v194 = vmul.f32 %v189, %v193
    %vm195 = vweird.f32 %v188
    %vm196 = vweird.f32 %v189
    %vm197 = vmor %vm195, %vm196
    %v198 = vsel %vm197, %v189, %v194
    %v199 = vmul.f32 %v187, %v198
    %v200 = vperm.slane %v174, 0
    %v201 = vmul.f32 %v199, %v200
    %v202 = vperm.slane %v175, 0
    %v203 = vadd.f32 %v201, %v202
    %v204 = vpack.c.bf16 %v203, %v203
    %v205 = vld [vmem:[#allocation4 + $0x40] sm:$0xf]
    %v206 = vld [vmem:[#allocation4 + $0x44] sm:$0xf]
    %v207 = vld [vmem:[#allocation4 + $0x48] sm:$0xf]
    %v208 = vld [vmem:[#allocation4 + $0x4c] sm:$0xf]
    %v209 = vld [vmem:[#allocation4 + $0x50] sm:$0xf]
    %v210 = vld [vmem:[#allocation4 + $0x54] sm:$0xf]
    %v211 = vld [vmem:[#allocation4 + $0x58] sm:$0xf]
    %v212 = vld [vmem:[#allocation4 + $0x5c] sm:$0xf]
    %v213 = vld [vmem:[#allocation4 + $0x60] sm:$0xf]
    %v214 = vld [vmem:[#allocation4 + $0x64] sm:$0xf]
    %v215 = vld [vmem:[#allocation4 + $0x68] sm:$0xf]
    %v216 = vld [vmem:[#allocation4 + $0x6c] sm:$0xf]
    %v217 = vld [vmem:[#allocation4 + $0x70] sm:$0xf]
    %v218 = vld [vmem:[#allocation4 + $0x74] sm:$0xf]
    %v219 = vld [vmem:[#allocation4 + $0x78] sm:$0xf]
    %v220 = vld [vmem:[#allocation4 + $0x7c] sm:$0xf]
    %v221 = vld [vmem:[#allocation6 + $0x3] sm:$0x1]
    %v222 = vperm.slane %v221, 0
    %v239 = vunpack.c.l.b16 %v205
    %v240 = vunpack.c.l.b16 %v206
    %v241 = vunpack.c.l.b16 %v207
    %v242 = vunpack.c.l.b16 %v208
    %v243 = vunpack.c.l.b16 %v209
    %v244 = vunpack.c.l.b16 %v210
    %v245 = vunpack.c.l.b16 %v211
    %v246 = vunpack.c.l.b16 %v212
    %v247 = vunpack.c.l.b16 %v213
    %v248 = vunpack.c.l.b16 %v214
    %v249 = vunpack.c.l.b16 %v215
    %v250 = vunpack.c.l.b16 %v216
    %v251 = vunpack.c.l.b16 %v217
    %v252 = vunpack.c.l.b16 %v218
    %v253 = vunpack.c.l.b16 %v219
    %v254 = vunpack.c.l.b16 %v220
    %v255 = vpack.c.b16 %v240, %v239
    %v256 = vpack.c.b16 %v242, %v241
    %v257 = vpack.c.b16 %v244, %v243
    %v258 = vpack.c.b16 %v246, %v245
    %v259 = vpack.c.b16 %v248, %v247
    %v260 = vpack.c.b16 %v250, %v249
    %v261 = vpack.c.b16 %v252, %v251
    %v262 = vpack.c.b16 %v254, %v253
    %271 = vmatpush.bf16.msra.mxu0 %v262
    %272 = vmatpush.bf16.msra.mxu0 %v261
    %273 = vmatpush.bf16.msra.mxu0 %v260
    %274 = vmatpush.bf16.msra.mxu0 %v259
    %275 = vmatpush.bf16.msra.mxu0 %v258
    %276 = vmatpush.bf16.msra.mxu0 %v257
    %277 = vmatpush.bf16.msra.mxu0 %v256
    %278 = vmatpush.bf16.msra.mxu0 %v255
    %279 = vmatmul.bf16.gmra.mxu0 %v204
    %v280 = vpop.f32.mrf.mxu0
    %v281 = vadd.f32 %v222, %v280
    %v282 = vpop.f32.mrf.mxu0
    %283 = vdwg.mxu0
    %v284 = vld [vmem:[#allocation6 + $0x4] sm:$0x1]
    %v285 = vld [vmem:[#allocation6 + $0x5] sm:$0x1]
    %vm286 = vcmask 517120
    %v287 = vsel %vm286, %v281, 0.0
    %288 = vadd.xlane.f32.xlu0 %v287
    %v289 = vpop.xlane.xlu0 %288
    %v290 = vrcp.pop 64.0
    %v291 = vmul.f32 64.0, %v290
    %v292 = vsub.f32 1.0, %v291
    %v293 = vmul.f32 %v290, %v292
    %v294 = vadd.f32 %v290, %v293
    %vm295 = vweird.f32 %v290
    %v296 = vsel %vm295, %v290, %v294
    %v297 = vmul.f32 %v289, %v296
    %v298 = vmul.f32 %v281, %v281
    %v299 = vsel %vm286, %v298, 0.0
    %300 = vadd.xlane.f32.xlu0 %v299
    %v301 = vpop.xlane.xlu0 %300
    %v302 = vmul.f32 %v301, %v296
    %v303 = vmul.f32 %v297, %v297
    %v304 = vsub.f32 %v302, %v303
    %v305 = vsub.f32 %v281, %v297
    %v306 = vadd.f32 %v304, 1e-05
    %v307 = vrsqrt.pop %v306
    %v308 = vmul.f32 %v307, %v306
    %v309 = vmul.f32 %v308, %v307
    %v310 = vmul.f32 0.5, %v309
    %v311 = vsub.f32 1.5, %v310
    %v312 = vmul.f32 %v307, %v311
    %vm313 = vweird.f32 %v306
    %vm314 = vweird.f32 %v307
    %vm315 = vmor %vm313, %vm314
    %v316 = vsel %vm315, %v307, %v312
    %v317 = vmul.f32 %v305, %v316
    %v318 = vperm.slane %v284, 0
    %v319 = vmul.f32 %v317, %v318
    %v320 = vperm.slane %v285, 0
    %v321 = vadd.f32 %v319, %v320
    %v322 = vmax.f32 %v321, 0.0
    %v323 = vpack.c.bf16 %v322, %v322
    %v324 = vld [vmem:[#allocation4 + $0x80] sm:$0xf]
    %v325 = vld [vmem:[#allocation4 + $0x84] sm:$0xf]
    %v326 = vld [vmem:[#allocation4 + $0x88] sm:$0xf]
    %v327 = vld [vmem:[#allocation4 + $0x8c] sm:$0xf]
    %v328 = vld [vmem:[#allocation4 + $0x90] sm:$0xf]
    %v329 = vld [vmem:[#allocation4 + $0x94] sm:$0xf]
    %v330 = vld [vmem:[#allocation4 + $0x98] sm:$0xf]
    %v331 = vld [vmem:[#allocation4 + $0x9c] sm:$0xf]
    %v332 = vld [vmem:[#allocation6 + $0x6] sm:$0x1]
    %v333 = vperm.slane %v332, 0
    %v342 = vunpack.c.l.b16 %v324
    %v343 = vunpack.c.l.b16 %v325
    %v344 = vunpack.c.l.b16 %v326
    %v345 = vunpack.c.l.b16 %v327
    %v346 = vunpack.c.l.b16 %v328
    %v347 = vunpack.c.l.b16 %v329
    %v348 = vunpack.c.l.b16 %v330
    %v349 = vunpack.c.l.b16 %v331
    %v350 = vpack.c.b16 %v343, %v342
    %v351 = vpack.c.b16 %v345, %v344
    %v352 = vpack.c.b16 %v347, %v346
    %v353 = vpack.c.b16 %v349, %v348
    %vm358 = vcmask 523264
    %v360 = vsel %vm358, %v323, 0
    %362 = vmatpush.bf16.msra.mxu0 0
    %363 = vmatpush.bf16.msra.mxu0 0
    %364 = vmatpush.bf16.msra.mxu0 0
    %365 = vmatpush.bf16.msra.mxu0 0
    %366 = vmatpush.bf16.msra.mxu0 %v353
    %367 = vmatpush.bf16.msra.mxu0 %v352
    %368 = vmatpush.bf16.msra.mxu0 %v351
    %369 = vmatpush.bf16.msra.mxu0 %v350
    %370 = vmatmul.bf16.gmra.mxu0 %v360
    %v371 = vpop.f32.mrf.mxu0
    %v372 = vadd.f32 %v333, %v371
    %v373 = vpop.f32.mrf.mxu0
    %374 = vdwg.mxu0
    %v375 = vld [vmem:[#allocation6 + $0x7] sm:$0x1]
    %v376 = vld [vmem:[#allocation6 + $0x8] sm:$0x1]
    %vm377 = vcmask 254976
    %v378 = vsel %vm377, %v372, 0.0
    %379 = vadd.xlane.f32.xlu0 %v378
    %v380 = vpop.xlane.xlu0 %379
    %v381 = vrcp.pop 32.0
    %v382 = vmul.f32 32.0, %v381
    %v383 = vsub.f32 1.0, %v382
    %v384 = vmul.f32 %v381, %v383
    %v385 = vadd.f32 %v381, %v384
    %vm386 = vweird.f32 %v381
    %v387 = vsel %vm386, %v381, %v385
    %v388 = vmul.f32 %v380, %v387
    %v389 = vmul.f32 %v372, %v372
    %v390 = vsel %vm377, %v389, 0.0
    %391 = vadd.xlane.f32.xlu0 %v390
    %v392 = vpop.xlane.xlu0 %391
    %v393 = vmul.f32 %v392, %v387
    %v394 = vmul.f32 %v388, %v388
    %v395 = vsub.f32 %v393, %v394
    %v396 = vsub.f32 %v372, %v388
    %v397 = vadd.f32 %v395, 1e-05
    %v398 = vrsqrt.pop %v397
    %v399 = vmul.f32 %v398, %v397
    %v400 = vmul.f32 %v399, %v398
    %v401 = vmul.f32 0.5, %v400
    %v402 = vsub.f32 1.5, %v401
    %v403 = vmul.f32 %v398, %v402
    %vm404 = vweird.f32 %v397
    %vm405 = vweird.f32 %v398
    %vm406 = vmor %vm404, %vm405
    %v407 = vsel %vm406, %v398, %v403
    %v408 = vmul.f32 %v396, %v407
    %v409 = vperm.slane %v375, 0
    %v410 = vmul.f32 %v408, %v409
    %v411 = vperm.slane %v376, 0
    %v412 = vadd.f32 %v410, %v411
    %v413 = vmax.f32 %v412, 0.0
    %v414 = vmax.f32 %v413, -10.0
    %v415 = vmin.f32 %v414, 10.0
    %v416 = vpack.c.bf16 %v415, %v415
    %v417 = vld [vmem:[#allocation4 + $0xa0] sm:$0xf]
    %v418 = vld [vmem:[#allocation4 + $0xa4] sm:$0xf]
    %v419 = vld [vmem:[#allocation4 + $0xa8] sm:$0xf]
    %v420 = vld [vmem:[#allocation4 + $0xac] sm:$0xf]
    %v421 = vld [vmem:[#allocation6 + $0x9] sm:$0x1]
    %v422 = vperm.slane %v421, 0
    %v427 = vunpack.c.l.b16 %v417
    %v428 = vunpack.c.l.b16 %v418
    %v429 = vunpack.c.l.b16 %v419
    %v430 = vunpack.c.l.b16 %v420
    %v431 = vpack.c.b16 %v428, %v427
    %v432 = vpack.c.b16 %v430, %v429
    %vm435 = vcmask 261120
    %v437 = vsel %vm435, %v416, 0
    %439 = vmatpush.bf16.msra.mxu0 0
    %440 = vmatpush.bf16.msra.mxu0 0
    %441 = vmatpush.bf16.msra.mxu0 0
    %442 = vmatpush.bf16.msra.mxu0 0
    %443 = vmatpush.bf16.msra.mxu0 0
    %444 = vmatpush.bf16.msra.mxu0 0
    %445 = vmatpush.bf16.msra.mxu0 %v432
    %446 = vmatpush.bf16.msra.mxu0 %v431
    %447 = vmatmul.bf16.gmra.mxu0 %v437
    %v448 = vpop.f32.mrf.mxu0
    %v449 = vadd.f32 %v422, %v448
    %v450 = vpop.f32.mrf.mxu0
    %451 = vdwg.mxu0
    %v452 = vmax.f32 %v449, 0.0
    %v453 = vpack.c.bf16 %v452, %v452
    %v454 = vld [vmem:[#allocation4 + $0xb0] sm:$0xf]
    %v455 = vld [vmem:[#allocation4 + $0xb4] sm:$0xf]
    %v456 = vld [vmem:[#allocation4 + $0xb8] sm:$0xf]
    %v457 = vld [vmem:[#allocation4 + $0xbc] sm:$0xf]
    %v458 = vld [vmem:[#allocation4 + $0xc0] sm:$0xf]
    %v459 = vld [vmem:[#allocation4 + $0xc4] sm:$0xf]
    %v460 = vld [vmem:[#allocation6 + $0xa] sm:$0x1]
    %v461 = vperm.slane %v460, 0
    %463 = vrot.lane.b32.xlu0 %v453, 126
    %v464 = vpop.permute.xlu0 %463
    %v471 = vunpack.c.l.b16 %v454
    %v472 = vunpack.c.l.b16 %v455
    %v473 = vunpack.c.l.b16 %v456
    %v474 = vunpack.c.l.b16 %v457
    %v475 = vunpack.c.l.b16 %v458
    %v476 = vunpack.c.l.b16 %v459
    %v477 = vpack.c.b16 %v472, %v471
    %v478 = vpack.c.b16 %v474, %v473
    %v479 = vpack.c.b16 %v476, %v475
    %vm483 = vcmask 392192
    %v485 = vsel %vm483, %v464, 0
    %487 = vmatpush.bf16.msra.mxu0 0
    %488 = vmatpush.bf16.msra.mxu0 0
    %489 = vmatpush.bf16.msra.mxu0 0
    %490 = vmatpush.bf16.msra.mxu0 0
    %491 = vmatpush.bf16.msra.mxu0 0
    %492 = vmatpush.bf16.msra.mxu0 %v479
    %493 = vmatpush.bf16.msra.mxu0 %v478
    %494 = vmatpush.bf16.msra.mxu0 %v477
    %495 = vmatmul.bf16.gmra.mxu0 %v485
    %v496 = vpop.f32.mrf.mxu0
    %v497 = vadd.f32 %v461, %v496
    %v498 = vpop.f32.mrf.mxu0
    %499 = vdwg.mxu0
    %v500 = vmul.f32 %v497, 0.33333334
    %v501 = vmul.f32 %v449, 0.7
    %v502 = vmul.f32 %v500, 0.3
    %v503 = vadd.f32 %v501, %v502
    %vm504 = vcmask 9216
    %505 = vst.msk [vmem:[%s3] sm:$0x3] %vm504, %v503
    %s506 = scalar_lea.vmem %s3, 2
    %507 = vst.msk [vmem:[%s506] sm:$0x3] %vm504, %v449
    %s508 = scalar_lea.vmem %s3, 4
    %509 = vst.msk [vmem:[%s508] sm:$0x3] %vm504, %v500
    // Predicated region
    $region26: #{tpu_custom_call.1} parent=1 // pred_check
      _
    $region27: #{tpu_custom_call.1} parent=1 // pred_check_branch
      %511 = sbr.rel (0) target = $region29
    $region28: #{tpu_custom_call.1} parent=1 // pred_region
      _
    $region29: #{tpu_custom_call.1} parent=1 // pred_fallthru
      _
    // Predicated region
    $region30: #{tpu_custom_call.1} parent=1 // pred_check
      _
    $region31: #{tpu_custom_call.1} parent=1 // pred_check_branch
      %513 = sbr.rel (0) target = $region33
    $region32: #{tpu_custom_call.1} parent=1 // pred_region
      _
    $region33: #{tpu_custom_call.1} parent=1 // pred_fallthru
      _
    %514 = vsyncpa [#allocation3], 1
    %515 = vsyncpa [#allocation5], 1

</llo_original>
